<compile_context>
chip_gen: v7x
topology: tpu7x:2x2x1
jax: 0.10.0
libtpu: 0.0.40
codegen_flags: <defaults>
</compile_context>

<pallas_src>
import jax
import jax.numpy as jnp
from jax.experimental import pallas as pl
from jax.experimental.pallas import tpu as pltpu


def _round_up(x, m):
    return ((x + m - 1) // m) * m


def _vmem_capacity_bytes():
    """Physical VMEM per TensorCore; conservative (v7x-sized) fallback."""
    try:
        return int(pltpu.get_tpu_info().vmem_capacity_bytes)
    except Exception:
        return 64 * 1024 * 1024


def _pick_tile(total, align, cap):
    """Largest t <= cap that divides `total` and is a multiple of `align`.

    `total` must already be a multiple of `align`. Guarantees zero extra
    padding beyond the minimal hardware alignment.
    """
    cap = max(align, min(cap, total))
    units = total // align
    for d in range(cap // align, 0, -1):
        if units % d == 0:
            return align * d
    return align


# ----------------------------- kernels --------------------------------------


def _matmul_single_k_kernel(x_ref, w_ref, o_ref):
    """Whole K in one block: no accumulator needed."""
    o_ref[...] = jnp.dot(x_ref[...], w_ref[...],
                         preferred_element_type=jnp.float32).astype(o_ref.dtype)


def _matmul_acc_out_kernel(x_ref, w_ref, o_ref):
    """K-tiled matmul, f32 output: accumulate directly into the resident
    output block (saves the scratch buffer and the final copy)."""
    @pl.when(pl.program_id(2) == 0)
    def _():
        o_ref[...] = jnp.zeros_like(o_ref)

    o_ref[...] += jnp.dot(x_ref[...], w_ref[...],
                          preferred_element_type=jnp.float32)


def _matmul_acc_scratch_kernel(x_ref, w_ref, o_ref, acc_ref):
    """K-tiled matmul with an f32 scratch accumulator (non-f32 outputs)."""
    @pl.when(pl.program_id(2) == 0)
    def _():
        acc_ref[...] = jnp.zeros_like(acc_ref)

    acc_ref[...] += jnp.dot(x_ref[...], w_ref[...],
                            preferred_element_type=jnp.float32)

    @pl.when(pl.program_id(2) == pl.num_programs(2) - 1)
    def _():
        o_ref[...] = acc_ref[...].astype(o_ref.dtype)


# ----------------------------- wrapper ---------------------------------------


def linear_forward(x, w, *, tm=None, tn=None, tk=None,
                   cast_operands_to_bf16=False):
    """Layer.forward equivalent: x @ w via a Pallas TPU kernel.

    x: (..., K), w: (K, N) -> (..., N) in x.dtype (f32 accumulation on MXU).
    Tile sizes are auto-picked as divisors of the minimally padded dims under
    a per-generation VMEM budget; explicit tm/tn/tk override.
    `cast_operands_to_bf16=True` is lossy (operand rounding) but recommended
    for inference on v6e/v7x.
    """
    orig_shape = x.shape
    if x.ndim != 2:
        x = x.reshape(-1, x.shape[-1])
    M, K = x.shape
    K2, N = w.shape
    if K != K2:
        raise ValueError(f"contraction dims must match: {K} vs {K2}")

    out_dtype = x.dtype
    in_dtype = jnp.bfloat16 if cast_operands_to_bf16 else x.dtype
    in_itemsize = jnp.dtype(in_dtype).itemsize
    out_itemsize = jnp.dtype(out_dtype).itemsize
    acc_into_out = jnp.dtype(out_dtype) == jnp.float32

    # dtype-aware sublane alignment: bf16 packs 16 rows / int8 packs 32 rows.
    sublane = {4: 8, 2: 16, 1: 32}.get(in_itemsize, 8)

    # --- Per-generation VMEM budget. -----------------------------------------
    vmem_cap = _vmem_capacity_bytes()
    if vmem_cap <= 64 * 1024 * 1024:                      # v7x-class (64 MiB)
        vmem_limit = min(48 * 1024 * 1024, int(vmem_cap * 0.75))
        tile_budget = min(int(vmem_limit * 0.85), 40 * 1024 * 1024)
    else:                                                 # v5e / v6e (128 MiB)
        vmem_limit = min(100 * 1024 * 1024, int(vmem_cap * 0.8))
        tile_budget = int(vmem_limit * 0.85)

    # Minimal hardware-friendly paddings.
    m_pad = _round_up(M, sublane)
    n_pad = _round_up(N, 128)
    k_pad = _round_up(K, 128)

    # Tile caps: lane-dense, wide output tiles (prefer growing N over M).
    cap_tm = 512
    cap_tn = 1024
    cap_tk = 512 if in_itemsize >= 4 else 1024

    tm_auto, tn_auto, tk_auto = tm is None, tn is None, tk is None

    # Weight-stationary fast path: the whole (padded) W as one resident,
    # single-buffered block, DMA'd once for the entire grid.
    ws = False
    if tn_auto and tk_auto:
        w_bytes = k_pad * n_pad * in_itemsize
        ws = w_bytes <= int(0.45 * vmem_limit)

    if ws:
        tk_sel, tn_sel = k_pad, n_pad
    else:
        tk_sel = _pick_tile(k_pad, 128, cap_tk) if tk_auto else min(tk, k_pad)
        tn_sel = _pick_tile(n_pad, 128, cap_tn) if tn_auto else min(tn, n_pad)
    tm_sel = _pick_tile(m_pad, sublane, cap_tm) if tm_auto else min(tm, m_pad)

    def tile_bytes(_tm, _tn, _tk, _ws):
        x_buf = 2 * _tm * _tk * in_itemsize                      # double-buffered
        w_buf = (_tk * _tn if _ws else 2 * _tk * _tn) * in_itemsize
        o_buf = 2 * _tm * _tn * out_itemsize
        acc = 0 if acc_into_out else _tm * _tn * 4
        return x_buf + w_buf + o_buf + acc

    # Shrink to the VMEM budget: tk first, then tm, then tn; drop the
    # weight-stationary path only as a last resort.
    for _ in range(64):
        if tile_bytes(tm_sel, tn_sel, tk_sel, ws) <= tile_budget:
            break
        if (not ws) and tk_auto and tk_sel > 128:
            tk_sel = _pick_tile(k_pad, 128, tk_sel // 2)
        elif tm_auto and tm_sel > sublane:
            tm_sel = _pick_tile(m_pad, sublane, tm_sel // 2)
        elif (not ws) and tn_auto and tn_sel > 128:
            tn_sel = _pick_tile(n_pad, 128, tn_sel // 2)
        elif ws:
            ws = False
            tk_sel = _pick_tile(k_pad, 128, cap_tk)
            tn_sel = _pick_tile(n_pad, 128, cap_tn)
            tm_sel = _pick_tile(m_pad, sublane, cap_tm)
        else:
            break

    Mp = _round_up(m_pad, tm_sel)
    Np = _round_up(n_pad, tn_sel)
    Kp = _round_up(k_pad, tk_sel)

    # Make sure both v7x TensorCores get work when everything fits one block.
    if tn_auto and (Mp // tm_sel) * (Np // tn_sel) == 1:
        half = _pick_tile(Np, 128, max(128, tn_sel // 2))
        if half < tn_sel:
            tn_sel = half

    w_resident = (tk_sel == Kp) and (tn_sel == Np)   # W is one grid-constant block
    grid_m, grid_n, grid_k = Mp // tm_sel, Np // tn_sel, Kp // tk_sel

    # --- Minimal padding; XLA may fuse it into the kernel's operand reads. ----
    xp = x.astype(in_dtype)
    wp = w.astype(in_dtype)
    if (Mp, Kp) != (M, K):
        xp = jnp.pad(xp, ((0, Mp - M), (0, Kp - K)))
    if (Kp, Np) != (K, N):
        wp = jnp.pad(wp, ((0, Kp - K), (0, Np - N)))

    cost = pl.CostEstimate(
        flops=2 * M * N * K,
        transcendentals=0,
        bytes_accessed=(M * K + K * N) * in_itemsize + M * N * out_itemsize,
    )

    if grid_k == 1:
        def run_single_k(single_buffer_w):
            if single_buffer_w:
                w_spec = pl.BlockSpec((Kp, tn_sel), lambda i, j: (0, j),
                                      pipeline_mode=pl.Buffered(1))
            else:
                w_spec = pl.BlockSpec((Kp, tn_sel), lambda i, j: (0, j))
            return pl.pallas_call(
                _matmul_single_k_kernel,
                out_shape=jax.ShapeDtypeStruct((Mp, Np), out_dtype),
                grid_spec=pltpu.PrefetchScalarGridSpec(
                    num_scalar_prefetch=0,
                    grid=(grid_m, grid_n),
                    in_specs=[
                        pl.BlockSpec((tm_sel, Kp), lambda i, j: (i, 0)),
                        w_spec,
                    ],
                    out_specs=pl.BlockSpec((tm_sel, tn_sel), lambda i, j: (i, j)),
                ),
                compiler_params=pltpu.CompilerParams(
                    dimension_semantics=("parallel", "parallel"),
                    vmem_limit_bytes=vmem_limit,
                    allow_input_fusion=[True, True],
                ),
                cost_estimate=cost,
            )(xp, wp)

        if w_resident:
            try:
                out_p = run_single_k(True)       # single-buffered resident W
            except Exception:
                out_p = run_single_k(False)      # safe fallback
        else:
            out_p = run_single_k(False)
    else:
        kernel = _matmul_acc_out_kernel if acc_into_out else _matmul_acc_scratch_kernel
        scratch = [] if acc_into_out else [pltpu.VMEM((tm_sel, tn_sel), jnp.float32)]
        out_p = pl.pallas_call(
            kernel,
            out_shape=jax.ShapeDtypeStruct((Mp, Np), out_dtype),
            grid_spec=pltpu.PrefetchScalarGridSpec(
                num_scalar_prefetch=0,
                grid=(grid_m, grid_n, grid_k),
                in_specs=[
                    pl.BlockSpec((tm_sel, tk_sel), lambda i, j, k: (i, k)),
                    pl.BlockSpec((tk_sel, tn_sel), lambda i, j, k: (k, j)),
                ],
                out_specs=pl.BlockSpec((tm_sel, tn_sel), lambda i, j, k: (i, j)),
                scratch_shapes=scratch,
            ),
            compiler_params=pltpu.CompilerParams(
                dimension_semantics=("parallel", "parallel", "arbitrary"),
                vmem_limit_bytes=vmem_limit,
                allow_input_fusion=[True, True],
            ),
            cost_estimate=cost,
        )(xp, wp)

    if (Mp, Np) != (M, N):
        out_p = out_p[:M, :N]
    if len(orig_shape) != 2:
        out_p = out_p.reshape(orig_shape[:-1] + (N,))
    return out_p


if __name__ == "__main__":
    key = jax.random.PRNGKey(0)
    kx, kw, kx2, kw2, kx3, kw3 = jax.random.split(key, 6)

    # Shapes consistent with the module: batch=8, in_features=32, out_features=64.
    # (torch.Tensor in __init__ is uninitialized; use a normal init here.)
    batch, n_in, n_out = 8, 32, 64
    x = jax.random.normal(kx, (batch, n_in), dtype=jnp.float32)
    w = jax.random.normal(kw, (n_in, n_out), dtype=jnp.float32) * 0.02
    out = jax.block_until_ready(linear_forward(x, w))
    ref = x @ w
    assert out.shape == (batch, n_out)
    assert jnp.allclose(out, ref, atol=1e-5, rtol=1e-5)

    # Ragged shapes exercising padding + the K-accumulate-into-output path.
    M2, K2, N2 = 40, 320, 200
    x2 = jax.random.normal(kx2, (M2, K2), dtype=jnp.float32)
    w2 = jax.random.normal(kw2, (K2, N2), dtype=jnp.float32) * 0.02
    out2 = jax.block_until_ready(linear_forward(x2, w2, tn=128, tk=128))
    ref2 = x2 @ w2
    assert out2.shape == (M2, N2)
    assert jnp.allclose(out2, ref2, atol=2e-3, rtol=2e-3)

    # bf16-operand path (v6e/v7x MXU-friendly), f32 accumulation.
    M3, K3, N3 = 24, 160, 192
    x3 = jax.random.normal(kx3, (M3, K3), dtype=jnp.float32)
    w3 = jax.random.normal(kw3, (K3, N3), dtype=jnp.float32) * 0.02
    out3 = jax.block_until_ready(
        linear_forward(x3, w3, cast_operands_to_bf16=True))
    ref3 = x3 @ w3
    assert out3.shape == (M3, N3)
    assert jnp.allclose(out3, ref3, atol=3e-2, rtol=3e-2)

    print("KERNEL_OK")
</pallas_src>

<mosaic_0001>
module attributes {stable_mosaic.version = 11 : i64} {
  func.func @_matmul_single_k_kernel(%arg0: i32, %arg1: i32, %arg2: memref<8x128xf32, #tpu.memory_space<vmem>>, %arg3: memref<128x128xf32, #tpu.memory_space<vmem>>, %arg4: memref<8x128xf32, #tpu.memory_space<vmem>>) attributes {dimension_semantics = [#tpu.dimension_semantics<parallel>, #tpu.dimension_semantics<parallel>], iteration_bounds = array<i64: 1, 1>, scalar_prefetch = 0 : i64, scratch_operands = 0 : i64, tpu.core_type = #tpu.core_type<tc>, window_params = [{transform_indices = @transform_0, window_bounds = array<i64: 8, 128>}, {pipeline_mode = #tpu.pipeline_mode<synchronous>, transform_indices = @transform_1, window_bounds = array<i64: 128, 128>}, {transform_indices = @transform_2, window_bounds = array<i64: 8, 128>}]} {
    %c0 = arith.constant 0 : index
    %c0_0 = arith.constant 0 : index
    %0 = vector.load %arg2[%c0, %c0_0] : memref<8x128xf32, #tpu.memory_space<vmem>>, vector<8x128xf32>
    %c0_1 = arith.constant 0 : index
    %c0_2 = arith.constant 0 : index
    %1 = vector.load %arg3[%c0_1, %c0_2] : memref<128x128xf32, #tpu.memory_space<vmem>>, vector<128x128xf32>
    %cst = arith.constant dense<0.000000e+00> : vector<8x128xf32>
    %2 = tpu.matmul %0, %1, %cst {dimension_numbers = #tpu.dot_dimension_numbers<[1], [0], [0], [1], [0, 0, 1, 1], [], []>} : vector<8x128xf32>, vector<128x128xf32>, vector<8x128xf32> -> vector<8x128xf32>
    %c0_3 = arith.constant 0 : index
    %c0_4 = arith.constant 0 : index
    %3 = vector.load %arg4[%c0_3, %c0_4] : memref<8x128xf32, #tpu.memory_space<vmem>>, vector<8x128xf32>
    tpu.vector_store %arg4[%c0_3, %c0_4], %2 {strides = array<i32>} : memref<8x128xf32, #tpu.memory_space<vmem>>, vector<8x128xf32>,
    return
  }
  func.func @transform_0(%arg0: i32, %arg1: i32) -> (i32, i32) {
    %c0_i32 = arith.constant 0 : i32
    %c0_i32_0 = arith.constant 0 : i32
    return %arg0, %c0_i32 : i32, i32
  }
  func.func @transform_1(%arg0: i32, %arg1: i32) -> (i32, i32) {
    %c0_i32 = arith.constant 0 : i32
    %c0_i32_0 = arith.constant 0 : i32
    return %c0_i32, %arg1 : i32, i32
  }
  func.func @transform_2(%arg0: i32, %arg1: i32) -> (i32, i32) {
    %c0_i32 = arith.constant 0 : i32
    return %arg0, %arg1 : i32, i32
  }
}

module attributes {stable_mosaic.version = 11 : i64} {
  func.func @_matmul_single_k_kernel(%arg0: i32, %arg1: i32, %arg2: memref<8x128xf32, #tpu.memory_space<vmem>>, %arg3: memref<128x128xf32, #tpu.memory_space<vmem>>, %arg4: memref<8x128xf32, #tpu.memory_space<vmem>>) attributes {dimension_semantics = [#tpu.dimension_semantics<parallel>, #tpu.dimension_semantics<parallel>], iteration_bounds = array<i64: 1, 1>, scalar_prefetch = 0 : i64, scratch_operands = 0 : i64, tpu.core_type = #tpu.core_type<tc>, window_params = [{transform_indices = @transform_0, window_bounds = array<i64: 8, 128>}, {transform_indices = @transform_1, window_bounds = array<i64: 128, 128>}, {transform_indices = @transform_2, window_bounds = array<i64: 8, 128>}]} {
    %c0 = arith.constant 0 : index
    %c0_0 = arith.constant 0 : index
    %0 = vector.load %arg2[%c0, %c0_0] : memref<8x128xf32, #tpu.memory_space<vmem>>, vector<8x128xf32>
    %c0_1 = arith.constant 0 : index
    %c0_2 = arith.constant 0 : index
    %1 = vector.load %arg3[%c0_1, %c0_2] : memref<128x128xf32, #tpu.memory_space<vmem>>, vector<128x128xf32>
    %cst = arith.constant dense<0.000000e+00> : vector<8x128xf32>
    %2 = tpu.matmul %0, %1, %cst {dimension_numbers = #tpu.dot_dimension_numbers<[1], [0], [0], [1], [0, 0, 1, 1], [], []>} : vector<8x128xf32>, vector<128x128xf32>, vector<8x128xf32> -> vector<8x128xf32>
    %c0_3 = arith.constant 0 : index
    %c0_4 = arith.constant 0 : index
    %3 = vector.load %arg4[%c0_3, %c0_4] : memref<8x128xf32, #tpu.memory_space<vmem>>, vector<8x128xf32>
    tpu.vector_store %arg4[%c0_3, %c0_4], %2 {strides = array<i32>} : memref<8x128xf32, #tpu.memory_space<vmem>>, vector<8x128xf32>,
    return
  }
  func.func @transform_0(%arg0: i32, %arg1: i32) -> (i32, i32) {
    %c0_i32 = arith.constant 0 : i32
    %c0_i32_0 = arith.constant 0 : i32
    return %arg0, %c0_i32 : i32, i32
  }
  func.func @transform_1(%arg0: i32, %arg1: i32) -> (i32, i32) {
    %c0_i32 = arith.constant 0 : i32
    %c0_i32_0 = arith.constant 0 : i32
    return %c0_i32, %arg1 : i32, i32
  }
  func.func @transform_2(%arg0: i32, %arg1: i32) -> (i32, i32) {
    %c0_i32 = arith.constant 0 : i32
    return %arg0, %arg1 : i32, i32
  }
}

</mosaic_0001>

<llo_original>
// kernel: tpu_custom_call.1
$region0: #{tpu_custom_call.1}
  #allocation0 [shape = 'u32[]', space=smem, size = 0x4, offset = 0x4, fixed_abs, tag = 'smem constant byte address 0x4 - core index']
  #allocation1 [shape = 'u32[144,128]{1,0:T(1,128)}', space=vmem, size = 0x12000, scoped, tag = 'internal scratch']
  %s0 = inlined_call_operand.hbm [shape: f32[8,128], index: 0, kind: input, shape index: {}]
  %s1 = inlined_call_operand.hbm [shape: f32[128,128], index: 1, kind: input, shape index: {}]
  %s2 = inlined_call_operand.hbm [shape: f32[8,128], index: 2, kind: output, shape index: {}]
  %s3 = sld [smem:[#allocation0]]
  $region26: #{tpu_custom_call.1} parent=0
    _
  %s5 = ssub.s32 1, %s3
  %s6 = scalar_select 0, %s5, %s3
  $region1: #{tpu_custom_call.1} parent=0
    #allocation2 [shape = 'u8[4096]{0}', space=vmem, size = 0x1000, scoped, tag = 'input window, operand 0, single buffered']
    #allocation3 [shape = 's32[1]{0}', space=sflag, size = 0x4, scoped, tag = 'scoped memory for tpu_custom_call.1']
    #allocation4 [shape = 's32[1]{0}', space=sflag, size = 0x4, scoped, tag = 'scoped memory for tpu_custom_call.1']
    #allocation5 [shape = 'u8[65536]{0}', space=vmem, size = 0x10000, scoped, tag = 'input window, operand 1, single buffered']
    #allocation6 [shape = 's32[1]{0}', space=sflag, size = 0x4, scoped, tag = 'scoped memory for tpu_custom_call.1']
    #allocation7 [shape = 'u8[4096]{0}', space=vmem, size = 0x1000, scoped, tag = 'output window, operand 0, single buffered']
    %7 = vsyncpa [#allocation3], 0
    %8 = vsyncpa [#allocation6], 0
    %9 = vsyncpa [#allocation4], 0
    // Predicated region
    $region2: #{tpu_custom_call.1} parent=1 // pred_check
      _
    $region3: #{tpu_custom_call.1} parent=1 // pred_check_branch
      %11 = sbr.rel (0) target = $region5
    $region4: #{tpu_custom_call.1} parent=1 // pred_region
      %s13 = ssub.s32 128, 128
      %14 = vsyncadd [#allocation3], %s13
      %s16 = sshll.u32 [#allocation2], 4
      %s17 = int_to_ptr.vmem [resolvable:$true] %s16
      %19 = dma.hbm_to_vmem [thread:$0]  %s0, 128, %s17, [#allocation3]
    $region5: #{tpu_custom_call.1} parent=1 // pred_fallthru
      _
    // Predicated region
    $region6: #{tpu_custom_call.1} parent=1 // pred_check
      _
    $region7: #{tpu_custom_call.1} parent=1 // pred_check_branch
      %21 = sbr.rel (0) target = $region9
    $region8: #{tpu_custom_call.1} parent=1 // pred_region
      %s23 = ssub.s32 2048, 2048
      %24 = vsyncadd [#allocation6], %s23
      %s25 = sshll.u32 [#allocation5], 4
      %s26 = int_to_ptr.vmem [resolvable:$true] %s25
      %31 = dma.hbm_to_vmem [thread:$0]  %s1, 2048, %s26, [#allocation6], 128, 128, 8
    $region9: #{tpu_custom_call.1} parent=1 // pred_fallthru
      _
    // Predicated region
    $region10: #{tpu_custom_call.1} parent=1 // pred_check
      _
    $region11: #{tpu_custom_call.1} parent=1 // pred_check_branch
      %33 = sbr.rel (0) target = $region13
    $region12: #{tpu_custom_call.1} parent=1 // pred_region
      %34 = dma.done [#allocation3], 128
    $region13: #{tpu_custom_call.1} parent=1 // pred_fallthru
      _
    // Predicated region
    $region14: #{tpu_custom_call.1} parent=1 // pred_check
      _
    $region15: #{tpu_custom_call.1} parent=1 // pred_check_branch
      %36 = sbr.rel (0) target = $region17
    $region16: #{tpu_custom_call.1} parent=1 // pred_region
      %37 = dma.done [#allocation6], 2048
    $region17: #{tpu_custom_call.1} parent=1 // pred_fallthru
      _
    %v38 = vld [vmem:[#allocation2] sm:$0xff]
    %v39 = vld [vmem:[#allocation5] sm:$0xff]
    %v40 = vld [vmem:[#allocation5 + $0x8] sm:$0xff]
    %v41 = vld [vmem:[#allocation5 + $0x10] sm:$0xff]
    %v42 = vld [vmem:[#allocation5 + $0x18] sm:$0xff]
    %v43 = vld [vmem:[#allocation5 + $0x20] sm:$0xff]
    %v44 = vld [vmem:[#allocation5 + $0x28] sm:$0xff]
    %v45 = vld [vmem:[#allocation5 + $0x30] sm:$0xff]
    %v46 = vld [vmem:[#allocation5 + $0x38] sm:$0xff]
    %v47 = vld [vmem:[#allocation5 + $0x40] sm:$0xff]
    %v48 = vld [vmem:[#allocation5 + $0x48] sm:$0xff]
    %v49 = vld [vmem:[#allocation5 + $0x50] sm:$0xff]
    %v50 = vld [vmem:[#allocation5 + $0x58] sm:$0xff]
    %v51 = vld [vmem:[#allocation5 + $0x60] sm:$0xff]
    %v52 = vld [vmem:[#allocation5 + $0x68] sm:$0xff]
    %v53 = vld [vmem:[#allocation5 + $0x70] sm:$0xff]
    %v54 = vld [vmem:[#allocation5 + $0x78] sm:$0xff]
    %55 = vmatprep.subr.mxu0 0.0
    %56 = vmatpush1.msra.mxu0 %v39
    %57 = vmatprep.subr.mxu0 0.0
    %58 = vmatpush1.msra.mxu0 %v40
    %59 = vmatprep.subr.mxu0 0.0
    %60 = vmatpush1.msra.mxu0 %v41
    %61 = vmatprep.subr.mxu0 0.0
    %62 = vmatpush1.msra.mxu0 %v42
    %63 = vmatprep.subr.mxu0 0.0
    %64 = vmatpush1.msra.mxu0 %v43
    %65 = vmatprep.subr.mxu0 0.0
    %66 = vmatpush1.msra.mxu0 %v44
    %67 = vmatprep.subr.mxu0 0.0
    %68 = vmatpush1.msra.mxu0 %v45
    %69 = vmatprep.subr.mxu0 0.0
    %70 = vmatpush1.msra.mxu0 %v46
    %71 = vmatprep.subr.mxu0 0.0
    %72 = vmatpush1.msra.mxu0 %v47
    %73 = vmatprep.subr.mxu0 0.0
    %74 = vmatpush1.msra.mxu0 %v48
    %75 = vmatprep.subr.mxu0 0.0
    %76 = vmatpush1.msra.mxu0 %v49
    %77 = vmatprep.subr.mxu0 0.0
    %78 = vmatpush1.msra.mxu0 %v50
    %79 = vmatprep.subr.mxu0 0.0
    %80 = vmatpush1.msra.mxu0 %v51
    %81 = vmatprep.subr.mxu0 0.0
    %82 = vmatpush1.msra.mxu0 %v52
    %83 = vmatprep.subr.mxu0 0.0
    %84 = vmatpush1.msra.mxu0 %v53
    %85 = vmatprep.subr.mxu0 0.0
    %86 = vmatpush1.msra.mxu0 %v54
    %87 = vmatprep.subr.mxu0 0.0
    %88 = vmatpush1.msra.mxu0 0.0
    %89 = vmatprep.subr.mxu0 0.0
    %90 = vmatpush1.msra.mxu0 0.0
    %91 = vmatprep.subr.mxu0 0.0
    %92 = vmatpush1.msra.mxu0 0.0
    %93 = vmatprep.subr.mxu0 0.0
    %94 = vmatpush1.msra.mxu0 0.0
    %95 = vmatprep.subr.mxu0 0.0
    %96 = vmatpush1.msra.mxu0 0.0
    %97 = vmatprep.subr.mxu0 0.0
    %98 = vmatpush1.msra.mxu0 0.0
    %99 = vmatprep.subr.mxu0 0.0
    %100 = vmatpush1.msra.mxu0 0.0
    %101 = vmatprep.subr.mxu0 0.0
    %102 = vmatpush1.msra.mxu0 0.0
    %103 = vmatprep.subr.mxu0 0.0
    %104 = vmatpush1.msra.mxu0 0.0
    %105 = vmatprep.subr.mxu0 0.0
    %106 = vmatpush1.msra.mxu0 0.0
    %107 = vmatprep.subr.mxu0 0.0
    %108 = vmatpush1.msra.mxu0 0.0
    %109 = vmatprep.subr.mxu0 0.0
    %110 = vmatpush1.msra.mxu0 0.0
    %111 = vmatprep.subr.mxu0 0.0
    %112 = vmatpush1.msra.mxu0 0.0
    %113 = vmatprep.subr.mxu0 0.0
    %114 = vmatpush1.msra.mxu0 0.0
    %115 = vmatprep.subr.mxu0 0.0
    %116 = vmatpush1.msra.mxu0 0.0
    %117 = vmatprep.subr.mxu0 0.0
    %118 = vmatpush1.msra.mxu0 0.0
    %119 = vmatprep.mubr.f32.mxu0 0.0
    %120 = vmatmul.mubr.f32.gmra.mrb[0].mxu0 %v38
    %v121 = vpop.f32.mrb[0].mxu0
    %v122 = vadd.f32 0.0, %v121
    %v123 = vpop.f32.mrb[0].mxu0
    %124 = vdwg.mxu0
    %125 = vst [vmem:[#allocation7] sm:$0xff] %v122
    // Predicated region
    $region18: #{tpu_custom_call.1} parent=1 // pred_check
      _
    $region19: #{tpu_custom_call.1} parent=1 // pred_check_branch
      %127 = sbr.rel (0) target = $region21
    $region20: #{tpu_custom_call.1} parent=1 // pred_region
      %s129 = ssub.s32 128, 128
      %130 = vsyncadd [#allocation4], %s129
      %s132 = sshll.u32 [#allocation7], 4
      %s133 = int_to_ptr.vmem [resolvable:$true] %s132
      %135 = dma.vmem_to_hbm [thread:$0]  %s133, 128, %s2, [#allocation4]
    $region21: #{tpu_custom_call.1} parent=1 // pred_fallthru
      _
    // Predicated region
    $region22: #{tpu_custom_call.1} parent=1 // pred_check
      _
    $region23: #{tpu_custom_call.1} parent=1 // pred_check_branch
      %137 = sbr.rel (0) target = $region25
    $region24: #{tpu_custom_call.1} parent=1 // pred_region
      %138 = dma.done [#allocation4], 128
    $region25: #{tpu_custom_call.1} parent=1 // pred_fallthru
      _
    %139 = vsyncpa [#allocation3], 1
    %140 = vsyncpa [#allocation6], 1
    %141 = vsyncpa [#allocation4], 1

// kernel: tpu_custom_call.1
$region0: #{tpu_custom_call.1}
  #allocation0 [shape = 'u32[]', space=smem, size = 0x4, offset = 0x4, fixed_abs, tag = 'smem constant byte address 0x4 - core index']
  #allocation1 [shape = 'u32[144,128]{1,0:T(1,128)}', space=vmem, size = 0x12000, scoped, tag = 'internal scratch']
  %s0 = inlined_call_operand.hbm [shape: f32[8,128], index: 0, kind: input, shape index: {}]
  %s1 = inlined_call_operand.hbm [shape: f32[128,128], index: 1, kind: input, shape index: {}]
  %s2 = inlined_call_operand.hbm [shape: f32[8,128], index: 2, kind: output, shape index: {}]
  %s3 = sld [smem:[#allocation0]]
  $region26: #{tpu_custom_call.1} parent=0
    _
  %s5 = ssub.s32 1, %s3
  %s6 = scalar_select 0, %s5, %s3
  $region1: #{tpu_custom_call.1} parent=0
    #allocation2 [shape = 'u8[4096]{0}', space=vmem, size = 0x1000, scoped, tag = 'input window, operand 0, single buffered']
    #allocation3 [shape = 's32[1]{0}', space=sflag, size = 0x4, scoped, tag = 'scoped memory for tpu_custom_call.1']
    #allocation4 [shape = 's32[1]{0}', space=sflag, size = 0x4, scoped, tag = 'scoped memory for tpu_custom_call.1']
    #allocation5 [shape = 'u8[65536]{0}', space=vmem, size = 0x10000, scoped, tag = 'input window, operand 1, single buffered']
    #allocation6 [shape = 's32[1]{0}', space=sflag, size = 0x4, scoped, tag = 'scoped memory for tpu_custom_call.1']
    #allocation7 [shape = 'u8[4096]{0}', space=vmem, size = 0x1000, scoped, tag = 'output window, operand 0, single buffered']
    %7 = vsyncpa [#allocation3], 0
    %8 = vsyncpa [#allocation6], 0
    %9 = vsyncpa [#allocation4], 0
    // Predicated region
    $region2: #{tpu_custom_call.1} parent=1 // pred_check
      _
    $region3: #{tpu_custom_call.1} parent=1 // pred_check_branch
      %11 = sbr.rel (0) target = $region5
    $region4: #{tpu_custom_call.1} parent=1 // pred_region
      %s13 = ssub.s32 128, 128
      %14 = vsyncadd [#allocation3], %s13
      %s16 = sshll.u32 [#allocation2], 4
      %s17 = int_to_ptr.vmem [resolvable:$true] %s16
      %19 = dma.hbm_to_vmem [thread:$0]  %s0, 128, %s17, [#allocation3]
    $region5: #{tpu_custom_call.1} parent=1 // pred_fallthru
      _
    // Predicated region
    $region6: #{tpu_custom_call.1} parent=1 // pred_check
      _
    $region7: #{tpu_custom_call.1} parent=1 // pred_check_branch
      %21 = sbr.rel (0) target = $region9
    $region8: #{tpu_custom_call.1} parent=1 // pred_region
      %s23 = ssub.s32 2048, 2048
      %24 = vsyncadd [#allocation6], %s23
      %s25 = sshll.u32 [#allocation5], 4
      %s26 = int_to_ptr.vmem [resolvable:$true] %s25
      %31 = dma.hbm_to_vmem [thread:$0]  %s1, 2048, %s26, [#allocation6], 128, 128, 8
    $region9: #{tpu_custom_call.1} parent=1 // pred_fallthru
      _
    // Predicated region
    $region10: #{tpu_custom_call.1} parent=1 // pred_check
      _
    $region11: #{tpu_custom_call.1} parent=1 // pred_check_branch
      %33 = sbr.rel (0) target = $region13
    $region12: #{tpu_custom_call.1} parent=1 // pred_region
      %34 = dma.done [#allocation3], 128
    $region13: #{tpu_custom_call.1} parent=1 // pred_fallthru
      _
    // Predicated region
    $region14: #{tpu_custom_call.1} parent=1 // pred_check
      _
    $region15: #{tpu_custom_call.1} parent=1 // pred_check_branch
      %36 = sbr.rel (0) target = $region17
    $region16: #{tpu_custom_call.1} parent=1 // pred_region
      %37 = dma.done [#allocation6], 2048
    $region17: #{tpu_custom_call.1} parent=1 // pred_fallthru
      _
    %v38 = vld [vmem:[#allocation2] sm:$0xff]
    %v39 = vld [vmem:[#allocation5] sm:$0xff]
    %v40 = vld [vmem:[#allocation5 + $0x8] sm:$0xff]
    %v41 = vld [vmem:[#allocation5 + $0x10] sm:$0xff]
    %v42 = vld [vmem:[#allocation5 + $0x18] sm:$0xff]
    %v43 = vld [vmem:[#allocation5 + $0x20] sm:$0xff]
    %v44 = vld [vmem:[#allocation5 + $0x28] sm:$0xff]
    %v45 = vld [vmem:[#allocation5 + $0x30] sm:$0xff]
    %v46 = vld [vmem:[#allocation5 + $0x38] sm:$0xff]
    %v47 = vld [vmem:[#allocation5 + $0x40] sm:$0xff]
    %v48 = vld [vmem:[#allocation5 + $0x48] sm:$0xff]
    %v49 = vld [vmem:[#allocation5 + $0x50] sm:$0xff]
    %v50 = vld [vmem:[#allocation5 + $0x58] sm:$0xff]
    %v51 = vld [vmem:[#allocation5 + $0x60] sm:$0xff]
    %v52 = vld [vmem:[#allocation5 + $0x68] sm:$0xff]
    %v53 = vld [vmem:[#allocation5 + $0x70] sm:$0xff]
    %v54 = vld [vmem:[#allocation5 + $0x78] sm:$0xff]
    %55 = vmatprep.subr.mxu0 0.0
    %56 = vmatpush1.msra.mxu0 %v39
    %57 = vmatprep.subr.mxu0 0.0
    %58 = vmatpush1.msra.mxu0 %v40
    %59 = vmatprep.subr.mxu0 0.0
    %60 = vmatpush1.msra.mxu0 %v41
    %61 = vmatprep.subr.mxu0 0.0
    %62 = vmatpush1.msra.mxu0 %v42
    %63 = vmatprep.subr.mxu0 0.0
    %64 = vmatpush1.msra.mxu0 %v43
    %65 = vmatprep.subr.mxu0 0.0
    %66 = vmatpush1.msra.mxu0 %v44
    %67 = vmatprep.subr.mxu0 0.0
    %68 = vmatpush1.msra.mxu0 %v45
    %69 = vmatprep.subr.mxu0 0.0
    %70 = vmatpush1.msra.mxu0 %v46
    %71 = vmatprep.subr.mxu0 0.0
    %72 = vmatpush1.msra.mxu0 %v47
    %73 = vmatprep.subr.mxu0 0.0
    %74 = vmatpush1.msra.mxu0 %v48
    %75 = vmatprep.subr.mxu0 0.0
    %76 = vmatpush1.msra.mxu0 %v49
    %77 = vmatprep.subr.mxu0 0.0
    %78 = vmatpush1.msra.mxu0 %v50
    %79 = vmatprep.subr.mxu0 0.0
    %80 = vmatpush1.msra.mxu0 %v51
    %81 = vmatprep.subr.mxu0 0.0
    %82 = vmatpush1.msra.mxu0 %v52
    %83 = vmatprep.subr.mxu0 0.0
    %84 = vmatpush1.msra.mxu0 %v53
    %85 = vmatprep.subr.mxu0 0.0
    %86 = vmatpush1.msra.mxu0 %v54
    %87 = vmatprep.subr.mxu0 0.0
    %88 = vmatpush1.msra.mxu0 0.0
    %89 = vmatprep.subr.mxu0 0.0
    %90 = vmatpush1.msra.mxu0 0.0
    %91 = vmatprep.subr.mxu0 0.0
    %92 = vmatpush1.msra.mxu0 0.0
    %93 = vmatprep.subr.mxu0 0.0
    %94 = vmatpush1.msra.mxu0 0.0
    %95 = vmatprep.subr.mxu0 0.0
    %96 = vmatpush1.msra.mxu0 0.0
    %97 = vmatprep.subr.mxu0 0.0
    %98 = vmatpush1.msra.mxu0 0.0
    %99 = vmatprep.subr.mxu0 0.0
    %100 = vmatpush1.msra.mxu0 0.0
    %101 = vmatprep.subr.mxu0 0.0
    %102 = vmatpush1.msra.mxu0 0.0
    %103 = vmatprep.subr.mxu0 0.0
    %104 = vmatpush1.msra.mxu0 0.0
    %105 = vmatprep.subr.mxu0 0.0
    %106 = vmatpush1.msra.mxu0 0.0
    %107 = vmatprep.subr.mxu0 0.0
    %108 = vmatpush1.msra.mxu0 0.0
    %109 = vmatprep.subr.mxu0 0.0
    %110 = vmatpush1.msra.mxu0 0.0
    %111 = vmatprep.subr.mxu0 0.0
    %112 = vmatpush1.msra.mxu0 0.0
    %113 = vmatprep.subr.mxu0 0.0
    %114 = vmatpush1.msra.mxu0 0.0
    %115 = vmatprep.subr.mxu0 0.0
    %116 = vmatpush1.msra.mxu0 0.0
    %117 = vmatprep.subr.mxu0 0.0
    %118 = vmatpush1.msra.mxu0 0.0
    %119 = vmatprep.mubr.f32.mxu0 0.0
    %120 = vmatmul.mubr.f32.gmra.mrb[0].mxu0 %v38
    %v121 = vpop.f32.mrb[0].mxu0
    %v122 = vadd.f32 0.0, %v121
    %v123 = vpop.f32.mrb[0].mxu0
    %124 = vdwg.mxu0
    %125 = vst [vmem:[#allocation7] sm:$0xff] %v122
    // Predicated region
    $region18: #{tpu_custom_call.1} parent=1 // pred_check
      _
    $region19: #{tpu_custom_call.1} parent=1 // pred_check_branch
      %127 = sbr.rel (0) target = $region21
    $region20: #{tpu_custom_call.1} parent=1 // pred_region
      %s129 = ssub.s32 128, 128
      %130 = vsyncadd [#allocation4], %s129
      %s132 = sshll.u32 [#allocation7], 4
      %s133 = int_to_ptr.vmem [resolvable:$true] %s132
      %135 = dma.vmem_to_hbm [thread:$0]  %s133, 128, %s2, [#allocation4]
    $region21: #{tpu_custom_call.1} parent=1 // pred_fallthru
      _
    // Predicated region
    $region22: #{tpu_custom_call.1} parent=1 // pred_check
      _
    $region23: #{tpu_custom_call.1} parent=1 // pred_check_branch
      %137 = sbr.rel (0) target = $region25
    $region24: #{tpu_custom_call.1} parent=1 // pred_region
      %138 = dma.done [#allocation4], 128
    $region25: #{tpu_custom_call.1} parent=1 // pred_fallthru
      _
    %139 = vsyncpa [#allocation3], 1
    %140 = vsyncpa [#allocation6], 1
    %141 = vsyncpa [#allocation4], 1

</llo_original>
